<compile_context>
chip_gen: v6e
topology: v6e:2x2x1
jax: 0.10.0
libtpu: 0.0.40
codegen_flags: <defaults>
</compile_context>

<pallas_src>
import functools

import jax
import jax.numpy as jnp
from jax.experimental import pallas as pl
from jax.experimental.pallas import tpu as pltpu


def _round_up(v, m):
    return ((v + m - 1) // m) * m


def _sublane_multiple(dtype):
    itemsize = jnp.dtype(dtype).itemsize
    if itemsize >= 4:
        return 8
    if itemsize == 2:
        return 16
    return 32


# Per-input-buffer VMEM budget.  Pallas double-buffers inputs -> ~16 MiB of
# input VMEM plus tiny output/scratch, safely under the 32 MiB scoped limit
# below on every generation (v7x physical VMEM is 64 MiB/TC), while making the
# per-step DMA large enough that fixed grid-step overhead is negligible.
_BUDGET_BYTES = 8 * 1024 * 1024
_VMEM_LIMIT_BYTES = 32 * 1024 * 1024


def _choose_tiles(num_rows, num_cols, dtype):
    """Pick (TILE_R, TILE_L) for the flattened (N*C, H*W) input."""
    itemsize = jnp.dtype(dtype).itemsize
    sub = _sublane_multiple(dtype)

    # Budget against the VMEM-padded footprint (lane dim padded to 128).
    cols_padded = _round_up(num_cols, 128)
    bytes_per_row = cols_padded * itemsize

    if sub * bytes_per_row <= _BUDGET_BYTES:
        # Common case: full H*W per block -> one contiguous DMA per block and
        # no reduction grid axis at all.
        tile_l = num_cols
        rows_fit = max(sub, (_BUDGET_BYTES // bytes_per_row) // sub * sub)
    else:
        # Truly huge spatial sizes only: chunk the lane axis in 128-aligned
        # pieces sized so at least one sublane-group of rows fits the budget.
        tile_l = max(128, (_BUDGET_BYTES // (sub * itemsize)) // 128 * 128)
        tile_l = min(tile_l, cols_padded)
        rows_fit = max(sub, (_BUDGET_BYTES // (tile_l * itemsize)) // sub * sub)

    tile_r = min(_round_up(num_rows, sub), rows_fit)

    # Keep >=2 (prefer 4) row tiles when rows allow: the row axis is the only
    # "parallel" axis, so a single row tile would leave one v7x TensorCore idle
    # and give the software pipeline nothing to overlap.
    if num_rows >= 2 * sub:
        target_tiles = 4 if num_rows >= 4 * sub else 2
        cap = _round_up(pl.cdiv(num_rows, target_tiles), sub)
        tile_r = min(tile_r, cap)

    # Prefer 128-aligned row tiles when large (cleaner layouts / stores).
    if tile_r >= 256:
        tile_r = (tile_r // 128) * 128

    return max(tile_r, sub), tile_l


def _gap_kernel_single(x_ref, o_ref, *, inv_area):
    # x_ref: (TILE_R, H*W) full-spatial block; o_ref: (TILE_R, 1).
    # No scratch, no masks, no init/finalize branches.
    s = jnp.sum(x_ref[...], axis=-1, dtype=jnp.float32, keepdims=True)
    o_ref[...] = (s * inv_area).astype(o_ref.dtype)


def _gap_kernel_multi(x_ref, o_ref, acc_ref, *, inv_area, total_cols, tile_l,
                      need_mask):
    # x_ref:   (TILE_R, TILE_L) chunk of the flattened (N*C, H*W) input
    # o_ref:   (TILE_R, 1) output column for this row tile
    # acc_ref: (TILE_R, 1) f32 accumulator, resident across the H*W-chunk axis
    k = pl.program_id(1)
    last = pl.num_programs(1) - 1

    @pl.when(k == 0)
    def _init():
        acc_ref[...] = jnp.zeros_like(acc_ref)

    if need_mask:
        # Only the final chunk is partial; keep the mask off the hot path.
        @pl.when(k < last)
        def _body():
            acc_ref[...] += jnp.sum(
                x_ref[...], axis=-1, dtype=jnp.float32, keepdims=True)

        @pl.when(k == last)
        def _body_masked():
            x = x_ref[...]
            col = k * tile_l + jax.lax.broadcasted_iota(jnp.int32, x.shape, 1)
            x = jnp.where(col < total_cols, x, jnp.zeros_like(x))
            acc_ref[...] += jnp.sum(
                x, axis=-1, dtype=jnp.float32, keepdims=True)
    else:
        acc_ref[...] += jnp.sum(
            x_ref[...], axis=-1, dtype=jnp.float32, keepdims=True)

    @pl.when(k == last)
    def _finalize():
        o_ref[...] = (acc_ref[...] * inv_area).astype(o_ref.dtype)


def global_avg_pool2d(x):
    """Pallas TPU implementation of F.avg_pool2d(x, kernel_size=x.shape[2:]).

    x: (N, C, H, W) -> (N, C, 1, 1)
    """
    n, c, h, w = x.shape
    rows = n * c
    cols = h * w

    tile_r, tile_l = _choose_tiles(rows, cols, x.dtype)
    num_row_tiles = pl.cdiv(rows, tile_r)
    num_col_chunks = pl.cdiv(cols, tile_l)
    rows_padded = num_row_tiles * tile_r

    x2 = x.reshape(rows, cols)  # free view for contiguous NCHW
    inv_area = 1.0 / float(cols)
    out_shape = jax.ShapeDtypeStruct((rows_padded, 1), x.dtype)

    if num_col_chunks == 1:
        out2 = pl.pallas_call(
            functools.partial(_gap_kernel_single, inv_area=inv_area),
            out_shape=out_shape,
            grid_spec=pltpu.PrefetchScalarGridSpec(
                num_scalar_prefetch=0,
                grid=(num_row_tiles,),
                in_specs=[pl.BlockSpec((tile_r, tile_l), lambda i: (i, 0))],
                out_specs=pl.BlockSpec((tile_r, 1), lambda i: (i, 0)),
            ),
            compiler_params=pltpu.CompilerParams(
                dimension_semantics=("parallel",),
                vmem_limit_bytes=_VMEM_LIMIT_BYTES,
            ),
        )(x2)
    else:
        need_mask = (cols % tile_l) != 0
        kernel = functools.partial(
            _gap_kernel_multi,
            inv_area=inv_area,
            total_cols=cols,
            tile_l=tile_l,
            need_mask=need_mask,
        )
        out2 = pl.pallas_call(
            kernel,
            out_shape=out_shape,
            grid_spec=pltpu.PrefetchScalarGridSpec(
                num_scalar_prefetch=0,
                # Row-tile axis first (parallel); H*W reduction axis last
                # (arbitrary) so the resident accumulator pattern is valid.
                grid=(num_row_tiles, num_col_chunks),
                in_specs=[pl.BlockSpec((tile_r, tile_l), lambda i, k: (i, k))],
                out_specs=pl.BlockSpec((tile_r, 1), lambda i, k: (i, 0)),
                scratch_shapes=[pltpu.VMEM((tile_r, 1), jnp.float32)],
            ),
            compiler_params=pltpu.CompilerParams(
                dimension_semantics=("parallel", "arbitrary"),
                vmem_limit_bytes=_VMEM_LIMIT_BYTES,
            ),
        )(x2)

    # Drop row padding (last row tile may contain undefined padded rows; they
    # are discarded here) and restore NCHW.
    return out2.reshape(-1)[:rows].reshape(n, c, 1, 1)


if __name__ == "__main__":
    key = jax.random.PRNGKey(0)
    # small shapes consistent with the module: batch=2, channels=4, spatial=16
    x = jax.random.normal(key, (2, 4, 16, 16), dtype=jnp.float32)

    out = global_avg_pool2d(x)
    out = jax.block_until_ready(out)

    # reference check (plain JAX)
    ref = jnp.mean(x, axis=(2, 3), keepdims=True)
    assert out.shape == (2, 4, 1, 1), out.shape
    assert jnp.allclose(out, ref, atol=1e-5, rtol=1e-5), "mismatch vs reference"

    print("KERNEL_OK")
</pallas_src>

<mosaic_0001>
module attributes {stable_mosaic.version = 11 : i64} {
  func.func @_gap_kernel_single(%arg0: i32, %arg1: memref<8x256xf32, #tpu.memory_space<vmem>>, %arg2: memref<8x1xf32, #tpu.memory_space<vmem>>) attributes {dimension_semantics = [#tpu.dimension_semantics<parallel>], iteration_bounds = array<i64: 1>, scalar_prefetch = 0 : i64, scratch_operands = 0 : i64, tpu.core_type = #tpu.core_type<tc>, window_params = [{transform_indices = @transform_0, window_bounds = array<i64: 8, 256>}, {transform_indices = @transform_1, window_bounds = array<i64: 8, 1>}]} {
    %c0 = arith.constant 0 : index
    %c0_0 = arith.constant 0 : index
    %0 = vector.load %arg1[%c0, %c0_0] : memref<8x256xf32, #tpu.memory_space<vmem>>, vector<8x256xf32>
    %cst = arith.constant dense<0.000000e+00> : vector<8xf32>
    %1 = vector.multi_reduction <add>, %0, %cst [1] : vector<8x256xf32> to vector<8xf32>
    %2 = vector.shape_cast %1 : vector<8xf32> to vector<8x1xf32>
    %cst_1 = arith.constant 3.906250e-03 : f32
    %3 = vector.broadcast %cst_1 : f32 to vector<8x1xf32>
    %4 = arith.mulf %2, %3 : vector<8x1xf32>
    %c0_2 = arith.constant 0 : index
    %c0_3 = arith.constant 0 : index
    %5 = vector.load %arg2[%c0_2, %c0_3] : memref<8x1xf32, #tpu.memory_space<vmem>>, vector<8x1xf32>
    tpu.vector_store %arg2[%c0_2, %c0_3], %4 {strides = array<i32>} : memref<8x1xf32, #tpu.memory_space<vmem>>, vector<8x1xf32>,
    return
  }
  func.func @transform_0(%arg0: i32) -> (i32, i32) {
    %c0_i32 = arith.constant 0 : i32
    %c0_i32_0 = arith.constant 0 : i32
    return %arg0, %c0_i32 : i32, i32
  }
  func.func @transform_1(%arg0: i32) -> (i32, i32) {
    %c0_i32 = arith.constant 0 : i32
    %c0_i32_0 = arith.constant 0 : i32
    return %arg0, %c0_i32 : i32, i32
  }
}

</mosaic_0001>

<llo_original>
// kernel: tpu_custom_call.1
$region0: #{tpu_custom_call.1}
  #allocation0 [shape = 'u32[]', space=smem, size = 0x4, offset = 0x4, fixed_abs, tag = 'smem constant byte address 0x4 - core index']
  #allocation1 [shape = 'u32[144,128]{1,0:T(1,128)}', space=vmem, size = 0x12000, scoped, tag = 'internal scratch']
  %s0 = inlined_call_operand.hbm [shape: f32[8,256], index: 0, kind: input, shape index: {}]
  %s1 = inlined_call_operand.vmem [shape: f32[8,1], index: 1, kind: output, shape index: {}]
  %s2 = sld [smem:[#allocation0]]
  $region18: #{tpu_custom_call.1} parent=0
    _
  %s4 = ssub.s32 1, %s2
  %s5 = scalar_select 0, %s4, %s2
  $region1: #{tpu_custom_call.1} parent=0
    #allocation2 [shape = 'u8[8192]{0}', space=vmem, size = 0x2000, scoped, tag = 'input window, operand 0, single buffered']
    #allocation3 [shape = 's32[1]{0}', space=sflag, size = 0x4, scoped, tag = 'scoped memory for tpu_custom_call.1']
    %6 = vsyncpa [#allocation3], 0
    // Predicated region
    $region2: #{tpu_custom_call.1} parent=1 // pred_check
      _
    $region3: #{tpu_custom_call.1} parent=1 // pred_check_branch
      %8 = sbr.rel (0) target = $region5
    $region4: #{tpu_custom_call.1} parent=1 // pred_region
      %s10 = ssub.s32 256, 256
      %11 = vsyncadd [#allocation3], %s10
      %s13 = sshll.u32 [#allocation2], 4
      %s14 = int_to_ptr.vmem [resolvable:$true] %s13
      %16 = dma.hbm_to_vmem [thread:$0]  %s0, 256, %s14, [#allocation3]
    $region5: #{tpu_custom_call.1} parent=1 // pred_fallthru
      _
    // Predicated region
    $region6: #{tpu_custom_call.1} parent=1 // pred_check
      _
    $region7: #{tpu_custom_call.1} parent=1 // pred_check_branch
      %18 = sbr.rel (0) target = $region9
    $region8: #{tpu_custom_call.1} parent=1 // pred_region
      %19 = dma.done [#allocation3], 256
    $region9: #{tpu_custom_call.1} parent=1 // pred_fallthru
      _
    %v20 = vld [vmem:[#allocation2] sm:$0xff]
    %v21 = vld [vmem:[#allocation2 + $0x8] sm:$0xff]
    %v22 = vadd.f32 %v20, %v21
    %23 = vadd.xlane.f32.xlu0 %v22
    %v24 = vpop.xlane.xlu0 %23
    %v25 = vmul.f32 %v24, 0.00390625
    %vm26 = vcmask 7168
    %27 = vst.msk [vmem:[%s1] sm:$0xff] %vm26, %v25
    // Predicated region
    $region10: #{tpu_custom_call.1} parent=1 // pred_check
      _
    $region11: #{tpu_custom_call.1} parent=1 // pred_check_branch
      %29 = sbr.rel (0) target = $region13
    $region12: #{tpu_custom_call.1} parent=1 // pred_region
      _
    $region13: #{tpu_custom_call.1} parent=1 // pred_fallthru
      _
    // Predicated region
    $region14: #{tpu_custom_call.1} parent=1 // pred_check
      _
    $region15: #{tpu_custom_call.1} parent=1 // pred_check_branch
      %31 = sbr.rel (0) target = $region17
    $region16: #{tpu_custom_call.1} parent=1 // pred_region
      _
    $region17: #{tpu_custom_call.1} parent=1 // pred_fallthru
      _
    %32 = vsyncpa [#allocation3], 1

</llo_original>
